<compile_context>
chip_gen: v5e
topology: v5e:2x2
jax: 0.10.0
libtpu: 0.0.40
codegen_flags: <defaults>
</compile_context>

<pallas_src>
import jax
import jax.numpy as jnp
from jax.experimental import pallas as pl
from jax.experimental.pallas import tpu as pltpu

_SUBLANE = 8
_LANE = 128


def _round_up(x, m):
    return (x + m - 1) // m * m


# ----------------------------- fused kernel ---------------------------------

def _make_fused_decoder_kernel(layer_num, hp):
    """Kernel over one batch tile: all GRU layers + FC epilogue, fully in VMEM."""

    def kernel(*refs):
        # refs = x, h0, (W_0, b_0), ..., (W_{L-1}, b_{L-1}), fc_w, fc_b,
        #        hid_out, fc_out
        x_ref, h0_ref = refs[0], refs[1]
        wb_refs = refs[2:2 + 2 * layer_num]
        fcw_ref = refs[2 + 2 * layer_num]
        fcb_ref = refs[3 + 2 * layer_num]
        hid_out_ref = refs[4 + 2 * layer_num]
        fc_out_ref = refs[5 + 2 * layer_num]

        x = x_ref[...]                                   # (TB, Hp)
        for l in range(layer_num):
            w_ref = wb_refs[2 * l]                       # (2*Hp, 4*Hp)
            b_ref = wb_refs[2 * l + 1]                   # (1, 4*Hp)
            h = h0_ref[l]                                # (TB, Hp)

            xh = jnp.concatenate([x, h], axis=1)         # (TB, 2*Hp), lane-aligned
            g = jnp.dot(xh, w_ref[...],
                        preferred_element_type=jnp.float32) + b_ref[...]

            # vreg-aligned 128-lane gate tiles: r | z | i_n | h_n
            r = jax.nn.sigmoid(g[:, 0 * hp:1 * hp])
            z = jax.nn.sigmoid(g[:, 1 * hp:2 * hp])
            n = jnp.tanh(g[:, 2 * hp:3 * hp] + r * g[:, 3 * hp:4 * hp])

            h_new = (1.0 - z) * n + z * h                # (TB, Hp)
            hid_out_ref[l] = h_new
            x = h_new                                    # input to next layer

        # dropout == identity (eval); FC epilogue, lane-dense output block
        fc = jnp.dot(x, fcw_ref[...],
                     preferred_element_type=jnp.float32) + fcb_ref[...]
        fc_out_ref[...] = fc

    return kernel


# ----------------------------- param init / packing -------------------------

def init_crnn_decoder_params(key, hidden_num, layer_num, input_size=2, out_size=2):
    """Raw params in PyTorch layout, U(-1/sqrt(H), 1/sqrt(H))."""
    bound = 1.0 / float(hidden_num) ** 0.5

    def uni(k, shape):
        return jax.random.uniform(k, shape, jnp.float32, -bound, bound)

    params = {"gru": [], "fc_w": None, "fc_b": None}
    for l in range(layer_num):
        din = input_size if l == 0 else hidden_num
        key, k1, k2, k3, k4 = jax.random.split(key, 5)
        params["gru"].append({
            "wih": uni(k1, (3 * hidden_num, din)),         # PyTorch (3H, Din)
            "whh": uni(k2, (3 * hidden_num, hidden_num)),  # PyTorch (3H, H)
            "bih": uni(k3, (3 * hidden_num,)),
            "bhh": uni(k4, (3 * hidden_num,)),
        })
    key, k1, k2 = jax.random.split(key, 3)
    params["fc_w"] = uni(k1, (out_size, hidden_num))       # PyTorch (out, in)
    params["fc_b"] = uni(k2, (out_size,))
    return params


def pack_crnn_decoder_params(raw):
    """Build fused (2*Hp, 4*Hp) weights + summed biases once, outside the hot path."""
    L = len(raw["gru"])
    H = raw["gru"][0]["whh"].shape[1]
    Hp = _round_up(H, _LANE)
    Op = _round_up(raw["fc_w"].shape[0], _LANE)

    packed = {"W": [], "b": [], "fc_w": None, "fc_b": None}
    for l in range(L):
        p = raw["gru"][l]
        din = p["wih"].shape[1]
        wih_t = p["wih"].T                               # (Din, 3H)
        whh_t = p["whh"].T                               # (H,   3H)

        W = jnp.zeros((2 * Hp, 4 * Hp), jnp.float32)
        # r gate: input + hidden
        W = W.at[:din, 0:H].set(wih_t[:, 0:H])
        W = W.at[Hp:Hp + H, 0:H].set(whh_t[:, 0:H])
        # z gate: input + hidden
        W = W.at[:din, Hp:Hp + H].set(wih_t[:, H:2 * H])
        W = W.at[Hp:Hp + H, Hp:Hp + H].set(whh_t[:, H:2 * H])
        # i_n: input only
        W = W.at[:din, 2 * Hp:2 * Hp + H].set(wih_t[:, 2 * H:3 * H])
        # h_n: hidden only
        W = W.at[Hp:Hp + H, 3 * Hp:3 * Hp + H].set(whh_t[:, 2 * H:3 * H])

        b = jnp.zeros((1, 4 * Hp), jnp.float32)
        b = b.at[0, 0:H].set(p["bih"][0:H] + p["bhh"][0:H])
        b = b.at[0, Hp:Hp + H].set(p["bih"][H:2 * H] + p["bhh"][H:2 * H])
        b = b.at[0, 2 * Hp:2 * Hp + H].set(p["bih"][2 * H:3 * H])
        b = b.at[0, 3 * Hp:3 * Hp + H].set(p["bhh"][2 * H:3 * H])

        packed["W"].append(W)
        packed["b"].append(b)

    o = raw["fc_w"].shape[0]
    packed["fc_w"] = jnp.zeros((Hp, Op), jnp.float32).at[:H, :o].set(raw["fc_w"].T)
    packed["fc_b"] = jnp.zeros((1, Op), jnp.float32).at[0, :o].set(raw["fc_b"])
    return packed


# ----------------------------- forward ---------------------------------------

@jax.jit
def crnn_decoder_forward(packed, inp, hidden_pre):
    """inp: (B, 1, 2); hidden_pre: (L, B, H) -> (fid (B,1,2), hidden (L,B,H))."""
    B = inp.shape[0]
    L, _, H = hidden_pre.shape
    Hp = packed["W"][0].shape[0] // 2
    Op = packed["fc_w"].shape[1]
    TB = _SUBLANE
    B_pad = _round_up(B, TB)

    # pad batch to full sublanes and features to full lanes (zeros are inert:
    # padded weight rows are zero, so padded lanes stay zero through all layers)
    x = jnp.zeros((B_pad, Hp), jnp.float32).at[:B, :inp.shape[2]].set(inp[:, 0, :])
    h0 = jnp.zeros((L, B_pad, Hp), jnp.float32).at[:, :B, :H].set(hidden_pre)

    kernel = _make_fused_decoder_kernel(L, Hp)

    in_specs = [
        pl.BlockSpec((TB, Hp), lambda i: (i, 0)),
        pl.BlockSpec((L, TB, Hp), lambda i: (0, i, 0)),
    ]
    flat_wb = []
    for l in range(L):
        in_specs.append(pl.BlockSpec((2 * Hp, 4 * Hp), lambda i: (0, 0)))
        in_specs.append(pl.BlockSpec((1, 4 * Hp), lambda i: (0, 0)))
        flat_wb += [packed["W"][l], packed["b"][l]]
    in_specs.append(pl.BlockSpec((Hp, Op), lambda i: (0, 0)))
    in_specs.append(pl.BlockSpec((1, Op), lambda i: (0, 0)))

    out_shape = (
        jax.ShapeDtypeStruct((L, B_pad, Hp), jnp.float32),
        jax.ShapeDtypeStruct((B_pad, Op), jnp.float32),
    )
    out_specs = (
        pl.BlockSpec((L, TB, Hp), lambda i: (0, i, 0)),
        pl.BlockSpec((TB, Op), lambda i: (i, 0)),
    )

    hid_out, fc_out = pl.pallas_call(
        kernel,
        grid=(B_pad // TB,),
        out_shape=out_shape,
        in_specs=in_specs,
        out_specs=out_specs,
        compiler_params=pltpu.CompilerParams(
            dimension_semantics=("parallel",),
            vmem_limit_bytes=32 * 1024 * 1024,
        ),
    )(x, h0, *flat_wb, packed["fc_w"], packed["fc_b"])

    hidden_decoder = hid_out[:, :B, :H]
    fid = fc_out[:B, :2][:, None, :]
    return fid, hidden_decoder


# ----------------------------- pure-JAX reference ----------------------------

def crnn_decoder_reference(raw, inp, hidden_pre):
    x = inp[:, 0, :]
    H = hidden_pre.shape[2]
    hs = []
    for l, p in enumerate(raw["gru"]):
        h = hidden_pre[l]
        gi = jnp.dot(x, p["wih"].T, precision=jax.lax.Precision.HIGHEST) + p["bih"]
        gh = jnp.dot(h, p["whh"].T, precision=jax.lax.Precision.HIGHEST) + p["bhh"]
        i_r, i_z, i_n = gi[:, :H], gi[:, H:2 * H], gi[:, 2 * H:]
        h_r, h_z, h_n = gh[:, :H], gh[:, H:2 * H], gh[:, 2 * H:]
        r = jax.nn.sigmoid(i_r + h_r)
        z = jax.nn.sigmoid(i_z + h_z)
        n = jnp.tanh(i_n + r * h_n)
        h_new = (1.0 - z) * n + z * h
        hs.append(h_new)
        x = h_new
    fc = jnp.dot(x, raw["fc_w"].T, precision=jax.lax.Precision.HIGHEST) + raw["fc_b"]
    return fc[:, None, :], jnp.stack(hs, axis=0)


# ----------------------------- main ------------------------------------------

if __name__ == "__main__":
    hidden_num = 32
    layer_num = 2
    batch = 2

    key = jax.random.PRNGKey(0)
    kp, kx, kh = jax.random.split(key, 3)

    raw = init_crnn_decoder_params(kp, hidden_num, layer_num)
    packed = pack_crnn_decoder_params(raw)

    inp = jax.random.normal(kx, (batch, 1, 2), jnp.float32)
    hidden_pre = jax.random.normal(kh, (layer_num, batch, hidden_num), jnp.float32)

    fid, hidden_decoder = crnn_decoder_forward(packed, inp, hidden_pre)
    jax.block_until_ready((fid, hidden_decoder))

    assert fid.shape == (batch, 1, 2)
    assert hidden_decoder.shape == (layer_num, batch, hidden_num)

    fid_ref, hid_ref = crnn_decoder_reference(raw, inp, hidden_pre)
    assert jnp.allclose(fid, fid_ref, atol=5e-3, rtol=5e-3)
    assert jnp.allclose(hidden_decoder, hid_ref, atol=5e-3, rtol=5e-3)

    print("KERNEL_OK")
</pallas_src>

<mosaic_0001>
module attributes {stable_mosaic.version = 11 : i64} {
  func.func @kernel(%arg0: i32, %arg1: memref<8x128xf32, #tpu.memory_space<vmem>>, %arg2: memref<2x8x128xf32, #tpu.memory_space<vmem>>, %arg3: memref<256x512xf32, #tpu.memory_space<vmem>>, %arg4: memref<1x512xf32, #tpu.memory_space<vmem>>, %arg5: memref<256x512xf32, #tpu.memory_space<vmem>>, %arg6: memref<1x512xf32, #tpu.memory_space<vmem>>, %arg7: memref<128x128xf32, #tpu.memory_space<vmem>>, %arg8: memref<1x128xf32, #tpu.memory_space<vmem>>, %arg9: memref<2x8x128xf32, #tpu.memory_space<vmem>>, %arg10: memref<8x128xf32, #tpu.memory_space<vmem>>) attributes {dimension_semantics = [#tpu.dimension_semantics<parallel>], iteration_bounds = array<i64: 1>, scalar_prefetch = 0 : i64, scratch_operands = 0 : i64, tpu.core_type = #tpu.core_type<tc>, window_params = [{transform_indices = @transform_0, window_bounds = array<i64: 8, 128>}, {transform_indices = @transform_1, window_bounds = array<i64: 2, 8, 128>}, {pipeline_mode = #tpu.pipeline_mode<synchronous>, transform_indices = @transform_2, window_bounds = array<i64: 256, 512>}, {pipeline_mode = #tpu.pipeline_mode<synchronous>, transform_indices = @transform_3, window_bounds = array<i64: 1, 512>}, {pipeline_mode = #tpu.pipeline_mode<synchronous>, transform_indices = @transform_4, window_bounds = array<i64: 256, 512>}, {pipeline_mode = #tpu.pipeline_mode<synchronous>, transform_indices = @transform_5, window_bounds = array<i64: 1, 512>}, {pipeline_mode = #tpu.pipeline_mode<synchronous>, transform_indices = @transform_6, window_bounds = array<i64: 128, 128>}, {pipeline_mode = #tpu.pipeline_mode<synchronous>, transform_indices = @transform_7, window_bounds = array<i64: 1, 128>}, {transform_indices = @transform_8, window_bounds = array<i64: 2, 8, 128>}, {transform_indices = @transform_9, window_bounds = array<i64: 8, 128>}]} {
    %c0 = arith.constant 0 : index
    %c0_0 = arith.constant 0 : index
    %0 = vector.load %arg1[%c0, %c0_0] : memref<8x128xf32, #tpu.memory_space<vmem>>, vector<8x128xf32>
    %c0_1 = arith.constant 0 : index
    %c0_2 = arith.constant 0 : index
    %c0_3 = arith.constant 0 : index
    %1 = vector.load %arg2[%c0_1, %c0_2, %c0_3] : memref<2x8x128xf32, #tpu.memory_space<vmem>>, vector<1x8x128xf32>
    %2 = vector.shape_cast %1 : vector<1x8x128xf32> to vector<8x128xf32>
    %3 = tpu.concatenate %0, %2 in 1 : vector<8x128xf32>, vector<8x128xf32> -> vector<8x256xf32>
    %c0_4 = arith.constant 0 : index
    %c0_5 = arith.constant 0 : index
    %4 = vector.load %arg3[%c0_4, %c0_5] : memref<256x512xf32, #tpu.memory_space<vmem>>, vector<256x512xf32>
    %cst = arith.constant dense<0.000000e+00> : vector<8x512xf32>
    %5 = tpu.matmul %3, %4, %cst {dimension_numbers = #tpu.dot_dimension_numbers<[1], [0], [0], [1], [0, 0, 1, 1], [], []>} : vector<8x256xf32>, vector<256x512xf32>, vector<8x512xf32> -> vector<8x512xf32>
    %c0_6 = arith.constant 0 : index
    %c0_7 = arith.constant 0 : index
    %6 = vector.load %arg4[%c0_6, %c0_7] : memref<1x512xf32, #tpu.memory_space<vmem>>, vector<1x512xf32>
    %7 = vector.broadcast %6 : vector<1x512xf32> to vector<8x512xf32>
    %8 = arith.addf %5, %7 : vector<8x512xf32>
    %9 = vector.extract_strided_slice %8 {offsets = [0, 0], sizes = [8, 128], strides = [1, 1]} : vector<8x512xf32> to vector<8x128xf32>
    %10 = arith.negf %9 : vector<8x128xf32>
    %11 = math.exp %10 : vector<8x128xf32>
    %cst_8 = arith.constant 1.000000e+00 : f32
    %12 = vector.broadcast %cst_8 : f32 to vector<8x128xf32>
    %13 = arith.addf %12, %11 : vector<8x128xf32>
    %14 = arith.divf %12, %13 : vector<8x128xf32>
    %15 = vector.extract_strided_slice %8 {offsets = [0, 128], sizes = [8, 128], strides = [1, 1]} : vector<8x512xf32> to vector<8x128xf32>
    %16 = arith.negf %15 : vector<8x128xf32>
    %17 = math.exp %16 : vector<8x128xf32>
    %cst_9 = arith.constant 1.000000e+00 : f32
    %18 = vector.broadcast %cst_9 : f32 to vector<8x128xf32>
    %19 = arith.addf %18, %17 : vector<8x128xf32>
    %20 = arith.divf %18, %19 : vector<8x128xf32>
    %21 = vector.extract_strided_slice %8 {offsets = [0, 256], sizes = [8, 128], strides = [1, 1]} : vector<8x512xf32> to vector<8x128xf32>
    %22 = vector.extract_strided_slice %8 {offsets = [0, 384], sizes = [8, 128], strides = [1, 1]} : vector<8x512xf32> to vector<8x128xf32>
    %23 = arith.mulf %14, %22 : vector<8x128xf32>
    %24 = arith.addf %21, %23 : vector<8x128xf32>
    %25 = math.tanh %24 : vector<8x128xf32>
    %cst_10 = arith.constant 1.000000e+00 : f32
    %26 = vector.broadcast %cst_10 : f32 to vector<8x128xf32>
    %27 = arith.subf %26, %20 : vector<8x128xf32>
    %28 = arith.mulf %27, %25 : vector<8x128xf32>
    %29 = arith.mulf %20, %2 : vector<8x128xf32>
    %30 = arith.addf %28, %29 : vector<8x128xf32>
    %c0_11 = arith.constant 0 : index
    %c0_12 = arith.constant 0 : index
    %c0_13 = arith.constant 0 : index
    %31 = vector.load %arg9[%c0_11, %c0_12, %c0_13] : memref<2x8x128xf32, #tpu.memory_space<vmem>>, vector<1x8x128xf32>
    %32 = vector.shape_cast %31 : vector<1x8x128xf32> to vector<8x128xf32>
    %33 = vector.shape_cast %30 : vector<8x128xf32> to vector<1x8x128xf32>
    tpu.vector_store %arg9[%c0_11, %c0_12, %c0_13], %33 {strides = array<i32>} : memref<2x8x128xf32, #tpu.memory_space<vmem>>, vector<1x8x128xf32>,
    %c1 = arith.constant 1 : index
    %c0_14 = arith.constant 0 : index
    %c0_15 = arith.constant 0 : index
    %34 = vector.load %arg2[%c1, %c0_14, %c0_15] : memref<2x8x128xf32, #tpu.memory_space<vmem>>, vector<1x8x128xf32>
    %35 = vector.shape_cast %34 : vector<1x8x128xf32> to vector<8x128xf32>
    %36 = tpu.concatenate %30, %35 in 1 : vector<8x128xf32>, vector<8x128xf32> -> vector<8x256xf32>
    %c0_16 = arith.constant 0 : index
    %c0_17 = arith.constant 0 : index
    %37 = vector.load %arg5[%c0_16, %c0_17] : memref<256x512xf32, #tpu.memory_space<vmem>>, vector<256x512xf32>
    %cst_18 = arith.constant dense<0.000000e+00> : vector<8x512xf32>
    %38 = tpu.matmul %36, %37, %cst_18 {dimension_numbers = #tpu.dot_dimension_numbers<[1], [0], [0], [1], [0, 0, 1, 1], [], []>} : vector<8x256xf32>, vector<256x512xf32>, vector<8x512xf32> -> vector<8x512xf32>
    %c0_19 = arith.constant 0 : index
    %c0_20 = arith.constant 0 : index
    %39 = vector.load %arg6[%c0_19, %c0_20] : memref<1x512xf32, #tpu.memory_space<vmem>>, vector<1x512xf32>
    %40 = vector.broadcast %39 : vector<1x512xf32> to vector<8x512xf32>
    %41 = arith.addf %38, %40 : vector<8x512xf32>
    %42 = vector.extract_strided_slice %41 {offsets = [0, 0], sizes = [8, 128], strides = [1, 1]} : vector<8x512xf32> to vector<8x128xf32>
    %43 = arith.negf %42 : vector<8x128xf32>
    %44 = math.exp %43 : vector<8x128xf32>
    %cst_21 = arith.constant 1.000000e+00 : f32
    %45 = vector.broadcast %cst_21 : f32 to vector<8x128xf32>
    %46 = arith.addf %45, %44 : vector<8x128xf32>
    %47 = arith.divf %45, %46 : vector<8x128xf32>
    %48 = vector.extract_strided_slice %41 {offsets = [0, 128], sizes = [8, 128], strides = [1, 1]} : vector<8x512xf32> to vector<8x128xf32>
    %49 = arith.negf %48 : vector<8x128xf32>
    %50 = math.exp %49 : vector<8x128xf32>
    %cst_22 = arith.constant 1.000000e+00 : f32
    %51 = vector.broadcast %cst_22 : f32 to vector<8x128xf32>
    %52 = arith.addf %51, %50 : vector<8x128xf32>
    %53 = arith.divf %51, %52 : vector<8x128xf32>
    %54 = vector.extract_strided_slice %41 {offsets = [0, 256], sizes = [8, 128], strides = [1, 1]} : vector<8x512xf32> to vector<8x128xf32>
    %55 = vector.extract_strided_slice %41 {offsets = [0, 384], sizes = [8, 128], strides = [1, 1]} : vector<8x512xf32> to vector<8x128xf32>
    %56 = arith.mulf %47, %55 : vector<8x128xf32>
    %57 = arith.addf %54, %56 : vector<8x128xf32>
    %58 = math.tanh %57 : vector<8x128xf32>
    %cst_23 = arith.constant 1.000000e+00 : f32
    %59 = vector.broadcast %cst_23 : f32 to vector<8x128xf32>
    %60 = arith.subf %59, %53 : vector<8x128xf32>
    %61 = arith.mulf %60, %58 : vector<8x128xf32>
    %62 = arith.mulf %53, %35 : vector<8x128xf32>
    %63 = arith.addf %61, %62 : vector<8x128xf32>
    %c1_24 = arith.constant 1 : index
    %c0_25 = arith.constant 0 : index
    %c0_26 = arith.constant 0 : index
    %64 = vector.load %arg9[%c1_24, %c0_25, %c0_26] : memref<2x8x128xf32, #tpu.memory_space<vmem>>, vector<1x8x128xf32>
    %65 = vector.shape_cast %64 : vector<1x8x128xf32> to vector<8x128xf32>
    %66 = vector.shape_cast %63 : vector<8x128xf32> to vector<1x8x128xf32>
    tpu.vector_store %arg9[%c1_24, %c0_25, %c0_26], %66 {strides = array<i32>} : memref<2x8x128xf32, #tpu.memory_space<vmem>>, vector<1x8x128xf32>,
    %c0_27 = arith.constant 0 : index
    %c0_28 = arith.constant 0 : index
    %67 = vector.load %arg7[%c0_27, %c0_28] : memref<128x128xf32, #tpu.memory_space<vmem>>, vector<128x128xf32>
    %cst_29 = arith.constant dense<0.000000e+00> : vector<8x128xf32>
    %68 = tpu.matmul %63, %67, %cst_29 {dimension_numbers = #tpu.dot_dimension_numbers<[1], [0], [0], [1], [0, 0, 1, 1], [], []>} : vector<8x128xf32>, vector<128x128xf32>, vector<8x128xf32> -> vector<8x128xf32>
    %c0_30 = arith.constant 0 : index
    %c0_31 = arith.constant 0 : index
    %69 = vector.load %arg8[%c0_30, %c0_31] : memref<1x128xf32, #tpu.memory_space<vmem>>, vector<1x128xf32>
    %70 = vector.broadcast %69 : vector<1x128xf32> to vector<8x128xf32>
    %71 = arith.addf %68, %70 : vector<8x128xf32>
    %c0_32 = arith.constant 0 : index
    %c0_33 = arith.constant 0 : index
    %72 = vector.load %arg10[%c0_32, %c0_33] : memref<8x128xf32, #tpu.memory_space<vmem>>, vector<8x128xf32>
    tpu.vector_store %arg10[%c0_32, %c0_33], %71 {strides = array<i32>} : memref<8x128xf32, #tpu.memory_space<vmem>>, vector<8x128xf32>,
    return
  }
  func.func @transform_0(%arg0: i32) -> (i32, i32) {
    %c0_i32 = arith.constant 0 : i32
    %c0_i32_0 = arith.constant 0 : i32
    return %arg0, %c0_i32 : i32, i32
  }
  func.func @transform_1(%arg0: i32) -> (i32, i32, i32) {
    %c0_i32 = arith.constant 0 : i32
    %c0_i32_0 = arith.constant 0 : i32
    %c0_i32_1 = arith.constant 0 : i32
    return %c0_i32, %arg0, %c0_i32_0 : i32, i32, i32
  }
  func.func @transform_2(%arg0: i32) -> (i32, i32) {
    %c0_i32 = arith.constant 0 : i32
    %c0_i32_0 = arith.constant 0 : i32
    %c0_i32_1 = arith.constant 0 : i32
    return %c0_i32, %c0_i32_0 : i32, i32
  }
  func.func @transform_3(%arg0: i32) -> (i32, i32) {
    %c0_i32 = arith.constant 0 : i32
    %c0_i32_0 = arith.constant 0 : i32
    %c0_i32_1 = arith.constant 0 : i32
    return %c0_i32, %c0_i32_0 : i32, i32
  }
  func.func @transform_4(%arg0: i32) -> (i32, i32) {
    %c0_i32 = arith.constant 0 : i32
    %c0_i32_0 = arith.constant 0 : i32
    %c0_i32_1 = arith.constant 0 : i32
    return %c0_i32, %c0_i32_0 : i32, i32
  }
  func.func @transform_5(%arg0: i32) -> (i32, i32) {
    %c0_i32 = arith.constant 0 : i32
    %c0_i32_0 = arith.constant 0 : i32
    %c0_i32_1 = arith.constant 0 : i32
    return %c0_i32, %c0_i32_0 : i32, i32
  }
  func.func @transform_6(%arg0: i32) -> (i32, i32) {
    %c0_i32 = arith.constant 0 : i32
    %c0_i32_0 = arith.constant 0 : i32
    %c0_i32_1 = arith.constant 0 : i32
    return %c0_i32, %c0_i32_0 : i32, i32
  }
  func.func @transform_7(%arg0: i32) -> (i32, i32) {
    %c0_i32 = arith.constant 0 : i32
    %c0_i32_0 = arith.constant 0 : i32
    %c0_i32_1 = arith.constant 0 : i32
    return %c0_i32, %c0_i32_0 : i32, i32
  }
  func.func @transform_8(%arg0: i32) -> (i32, i32, i32) {
    %c0_i32 = arith.constant 0 : i32
    %c0_i32_0 = arith.constant 0 : i32
    %c0_i32_1 = arith.constant 0 : i32
    return %c0_i32, %arg0, %c0_i32_0 : i32, i32, i32
  }
  func.func @transform_9(%arg0: i32) -> (i32, i32) {
    %c0_i32 = arith.constant 0 : i32
    %c0_i32_0 = arith.constant 0 : i32
    return %arg0, %c0_i32 : i32, i32
  }
}

</mosaic_0001>

<llo_original>
// kernel: crnn_decoder_forward.1
$region0: #{crnn_decoder_forward.1}
  #allocation0 [shape = 'u32[]', space=smem, size = 0x4, offset = 0x4, fixed_abs, tag = 'smem constant byte address 0x4 - core index']
  #allocation1 [shape = 'u32[72,128]{1,0:T(1,128)}', space=vmem, size = 0x9000, scoped, tag = 'internal scratch']
  %s0 = inlined_call_operand.vmem [shape: f32[8,128], index: 0, kind: input, shape index: {}]
  %s1 = inlined_call_operand.vmem [shape: f32[2,8,128], index: 1, kind: input, shape index: {}]
  %s2 = inlined_call_operand.hbm [shape: f32[256,512], index: 2, kind: input, shape index: {}]
  %s3 = inlined_call_operand.vmem [shape: f32[1,512], index: 3, kind: input, shape index: {}]
  %s4 = inlined_call_operand.hbm [shape: f32[256,512], index: 4, kind: input, shape index: {}]
  %s5 = inlined_call_operand.vmem [shape: f32[1,512], index: 5, kind: input, shape index: {}]
  %s6 = inlined_call_operand.hbm [shape: f32[128,128], index: 6, kind: input, shape index: {}]
  %s7 = inlined_call_operand.vmem [shape: f32[1,128], index: 7, kind: input, shape index: {}]
  %s8 = inlined_call_operand.vmem [shape: f32[2,8,128], index: 8, kind: output, shape index: {0}]
  %s9 = inlined_call_operand.vmem [shape: f32[8,128], index: 9, kind: output, shape index: {1}]
  %10 = xla_tuple %s8, %s9
  %s11 = sld [smem:[#allocation0]]
  $region62: #{crnn_decoder_forward.1} parent=0
    _
  %s13 = ssub.s32 1, %s11
  %s14 = scalar_select 0, %s13, %s11
  $region1: #{crnn_decoder_forward.1} parent=0
    #allocation2 [shape = 'u8[524288]{0}', space=vmem, size = 0x80000, scoped, tag = 'input window, operand 2, single buffered']
    #allocation3 [shape = 's32[1]{0}', space=sflag, size = 0x4, scoped, tag = 'scoped memory for crnn_decoder_forward.1']
    #allocation4 [shape = 'u8[524288]{0}', space=vmem, size = 0x80000, scoped, tag = 'input window, operand 4, single buffered']
    #allocation5 [shape = 's32[1]{0}', space=sflag, size = 0x4, scoped, tag = 'scoped memory for crnn_decoder_forward.1']
    #allocation6 [shape = 'u8[65536]{0}', space=vmem, size = 0x10000, scoped, tag = 'input window, operand 6, single buffered']
    %15 = vsyncpa [#allocation3], 0
    %16 = vsyncpa [#allocation5], 0
    // Predicated region
    $region2: #{crnn_decoder_forward.1} parent=1 // pred_check
      _
    $region3: #{crnn_decoder_forward.1} parent=1 // pred_check_branch
      %18 = sbr.rel (0) target = $region5
    $region4: #{crnn_decoder_forward.1} parent=1 // pred_region
      _
    $region5: #{crnn_decoder_forward.1} parent=1 // pred_fallthru
      _
    // Predicated region
    $region6: #{crnn_decoder_forward.1} parent=1 // pred_check
      _
    $region7: #{crnn_decoder_forward.1} parent=1 // pred_check_branch
      %20 = sbr.rel (0) target = $region9
    $region8: #{crnn_decoder_forward.1} parent=1 // pred_region
      _
    $region9: #{crnn_decoder_forward.1} parent=1 // pred_fallthru
      _
    // Predicated region
    $region10: #{crnn_decoder_forward.1} parent=1 // pred_check
      _
    $region11: #{crnn_decoder_forward.1} parent=1 // pred_check_branch
      %22 = sbr.rel (0) target = $region13
    $region12: #{crnn_decoder_forward.1} parent=1 // pred_region
      %24 = vsyncadd [#allocation3], 0
      %s25 = sshll.u32 %s2, 4
      %s26 = int_to_ptr.hbm [resolvable:$true] %s25
      %s27 = sshll.u32 [#allocation2], 4
      %s28 = int_to_ptr.vmem [resolvable:$true] %s27
      %33 = dma.hbm_to_vmem [thread:$0]  %s26, 16384, %s28, [#allocation3], 512, 512, 32
    $region13: #{crnn_decoder_forward.1} parent=1 // pred_fallthru
      _
    // Predicated region
    $region14: #{crnn_decoder_forward.1} parent=1 // pred_check
      _
    $region15: #{crnn_decoder_forward.1} parent=1 // pred_check_branch
      %35 = sbr.rel (0) target = $region17
    $region16: #{crnn_decoder_forward.1} parent=1 // pred_region
      _
    $region17: #{crnn_decoder_forward.1} parent=1 // pred_fallthru
      _
    // Predicated region
    $region18: #{crnn_decoder_forward.1} parent=1 // pred_check
      _
    $region19: #{crnn_decoder_forward.1} parent=1 // pred_check_branch
      %37 = sbr.rel (0) target = $region21
    $region20: #{crnn_decoder_forward.1} parent=1 // pred_region
      %39 = vsyncadd [#allocation5], 0
      %s40 = sshll.u32 %s4, 4
      %s41 = int_to_ptr.hbm [resolvable:$true] %s40
      %s42 = sshll.u32 [#allocation4], 4
      %s43 = int_to_ptr.vmem [resolvable:$true] %s42
      %48 = dma.hbm_to_vmem [thread:$0]  %s41, 16384, %s43, [#allocation5], 512, 512, 32
    $region21: #{crnn_decoder_forward.1} parent=1 // pred_fallthru
      _
    // Predicated region
    $region22: #{crnn_decoder_forward.1} parent=1 // pred_check
      _
    $region23: #{crnn_decoder_forward.1} parent=1 // pred_check_branch
      %50 = sbr.rel (0) target = $region25
    $region24: #{crnn_decoder_forward.1} parent=1 // pred_region
      _
    $region25: #{crnn_decoder_forward.1} parent=1 // pred_fallthru
      _
    // Predicated region
    $region26: #{crnn_decoder_forward.1} parent=1 // pred_check
      _
    $region27: #{crnn_decoder_forward.1} parent=1 // pred_check_branch
      %52 = sbr.rel (0) target = $region29
    $region28: #{crnn_decoder_forward.1} parent=1 // pred_region
      %54 = vsyncadd [#allocation5], 0
      %s55 = sshll.u32 %s6, 4
      %s56 = int_to_ptr.hbm [resolvable:$true] %s55
      %s57 = sshll.u32 [#allocation6], 4
      %s58 = int_to_ptr.vmem [resolvable:$true] %s57
      %63 = dma.hbm_to_vmem [thread:$0]  %s56, 2048, %s58, [#allocation5], 128, 128, 8
    $region29: #{crnn_decoder_forward.1} parent=1 // pred_fallthru
      _
    // Predicated region
    $region30: #{crnn_decoder_forward.1} parent=1 // pred_check
      _
    $region31: #{crnn_decoder_forward.1} parent=1 // pred_check_branch
      %65 = sbr.rel (0) target = $region33
    $region32: #{crnn_decoder_forward.1} parent=1 // pred_region
      _
    $region33: #{crnn_decoder_forward.1} parent=1 // pred_fallthru
      _
    // Predicated region
    $region34: #{crnn_decoder_forward.1} parent=1 // pred_check
      _
    $region35: #{crnn_decoder_forward.1} parent=1 // pred_check_branch
      %67 = sbr.rel (0) target = $region37
    $region36: #{crnn_decoder_forward.1} parent=1 // pred_region
      %69 = dma.done [#allocation3], 16384
    $region37: #{crnn_decoder_forward.1} parent=1 // pred_fallthru
      _
    // Predicated region
    $region38: #{crnn_decoder_forward.1} parent=1 // pred_check
      _
    $region39: #{crnn_decoder_forward.1} parent=1 // pred_check_branch
      %71 = sbr.rel (0) target = $region41
    $region40: #{crnn_decoder_forward.1} parent=1 // pred_region
      %73 = dma.done [#allocation5], 16384
    $region41: #{crnn_decoder_forward.1} parent=1 // pred_fallthru
      _
    // Predicated region
    $region42: #{crnn_decoder_forward.1} parent=1 // pred_check
      _
    $region43: #{crnn_decoder_forward.1} parent=1 // pred_check_branch
      %75 = sbr.rel (0) target = $region45
    $region44: #{crnn_decoder_forward.1} parent=1 // pred_region
      %77 = dma.done [#allocation5], 2048
    $region45: #{crnn_decoder_forward.1} parent=1 // pred_fallthru
      _
    %v78 = vld [vmem:[%s0] sm:$0xff]
    %v79 = vld [vmem:[%s1] sm:$0xff]
    %v80 = vld [vmem:[#allocation2] sm:$0xff]
    %v81 = vld [vmem:[#allocation2 + $0x8] sm:$0xff]
    %v82 = vld [vmem:[#allocation2 + $0x10] sm:$0xff]
    %v83 = vld [vmem:[#allocation2 + $0x18] sm:$0xff]
    %v84 = vld [vmem:[#allocation2 + $0x20] sm:$0xff]
    %v85 = vld [vmem:[#allocation2 + $0x28] sm:$0xff]
    %v86 = vld [vmem:[#allocation2 + $0x30] sm:$0xff]
    %v87 = vld [vmem:[#allocation2 + $0x38] sm:$0xff]
    %v88 = vld [vmem:[#allocation2 + $0x40] sm:$0xff]
    %v89 = vld [vmem:[#allocation2 + $0x48] sm:$0xff]
    %v90 = vld [vmem:[#allocation2 + $0x50] sm:$0xff]
    %v91 = vld [vmem:[#allocation2 + $0x58] sm:$0xff]
    %v92 = vld [vmem:[#allocation2 + $0x60] sm:$0xff]
    %v93 = vld [vmem:[#allocation2 + $0x68] sm:$0xff]
    %v94 = vld [vmem:[#allocation2 + $0x70] sm:$0xff]
    %v95 = vld [vmem:[#allocation2 + $0x78] sm:$0xff]
    %v96 = vld [vmem:[#allocation2 + $0x80] sm:$0xff]
    %v97 = vld [vmem:[#allocation2 + $0x88] sm:$0xff]
    %v98 = vld [vmem:[#allocation2 + $0x90] sm:$0xff]
    %v99 = vld [vmem:[#allocation2 + $0x98] sm:$0xff]
    %v100 = vld [vmem:[#allocation2 + $0xa0] sm:$0xff]
    %v101 = vld [vmem:[#allocation2 + $0xa8] sm:$0xff]
    %v102 = vld [vmem:[#allocation2 + $0xb0] sm:$0xff]
    %v103 = vld [vmem:[#allocation2 + $0xb8] sm:$0xff]
    %v104 = vld [vmem:[#allocation2 + $0xc0] sm:$0xff]
    %v105 = vld [vmem:[#allocation2 + $0xc8] sm:$0xff]
    %v106 = vld [vmem:[#allocation2 + $0xd0] sm:$0xff]
    %v107 = vld [vmem:[#allocation2 + $0xd8] sm:$0xff]
    %v108 = vld [vmem:[#allocation2 + $0xe0] sm:$0xff]
    %v109 = vld [vmem:[#allocation2 + $0xe8] sm:$0xff]
    %v110 = vld [vmem:[#allocation2 + $0xf0] sm:$0xff]
    %v111 = vld [vmem:[#allocation2 + $0xf8] sm:$0xff]
    %v112 = vld [vmem:[#allocation2 + $0x100] sm:$0xff]
    %v113 = vld [vmem:[#allocation2 + $0x108] sm:$0xff]
    %v114 = vld [vmem:[#allocation2 + $0x110] sm:$0xff]
    %v115 = vld [vmem:[#allocation2 + $0x118] sm:$0xff]
    %v116 = vld [vmem:[#allocation2 + $0x120] sm:$0xff]
    %v117 = vld [vmem:[#allocation2 + $0x128] sm:$0xff]
    %v118 = vld [vmem:[#allocation2 + $0x130] sm:$0xff]
    %v119 = vld [vmem:[#allocation2 + $0x138] sm:$0xff]
    %v120 = vld [vmem:[#allocation2 + $0x140] sm:$0xff]
    %v121 = vld [vmem:[#allocation2 + $0x148] sm:$0xff]
    %v122 = vld [vmem:[#allocation2 + $0x150] sm:$0xff]
    %v123 = vld [vmem:[#allocation2 + $0x158] sm:$0xff]
    %v124 = vld [vmem:[#allocation2 + $0x160] sm:$0xff]
    %v125 = vld [vmem:[#allocation2 + $0x168] sm:$0xff]
    %v126 = vld [vmem:[#allocation2 + $0x170] sm:$0xff]
    %v127 = vld [vmem:[#allocation2 + $0x178] sm:$0xff]
    %v128 = vld [vmem:[#allocation2 + $0x180] sm:$0xff]
    %v129 = vld [vmem:[#allocation2 + $0x188] sm:$0xff]
    %v130 = vld [vmem:[#allocation2 + $0x190] sm:$0xff]
    %v131 = vld [vmem:[#allocation2 + $0x198] sm:$0xff]
    %v132 = vld [vmem:[#allocation2 + $0x1a0] sm:$0xff]
    %v133 = vld [vmem:[#allocation2 + $0x1a8] sm:$0xff]
    %v134 = vld [vmem:[#allocation2 + $0x1b0] sm:$0xff]
    %v135 = vld [vmem:[#allocation2 + $0x1b8] sm:$0xff]
    %v136 = vld [vmem:[#allocation2 + $0x1c0] sm:$0xff]
    %v137 = vld [vmem:[#allocation2 + $0x1c8] sm:$0xff]
    %v138 = vld [vmem:[#allocation2 + $0x1d0] sm:$0xff]
    %v139 = vld [vmem:[#allocation2 + $0x1d8] sm:$0xff]
    %v140 = vld [vmem:[#allocation2 + $0x1e0] sm:$0xff]
    %v141 = vld [vmem:[#allocation2 + $0x1e8] sm:$0xff]
    %v142 = vld [vmem:[#allocation2 + $0x1f0] sm:$0xff]
    %v143 = vld [vmem:[#allocation2 + $0x1f8] sm:$0xff]
    %v144 = vld [vmem:[#allocation2 + $0x200] sm:$0xff]
    %v145 = vld [vmem:[#allocation2 + $0x208] sm:$0xff]
    %v146 = vld [vmem:[#allocation2 + $0x210] sm:$0xff]
    %v147 = vld [vmem:[#allocation2 + $0x218] sm:$0xff]
    %v148 = vld [vmem:[#allocation2 + $0x220] sm:$0xff]
    %v149 = vld [vmem:[#allocation2 + $0x228] sm:$0xff]
    %v150 = vld [vmem:[#allocation2 + $0x230] sm:$0xff]
    %v151 = vld [vmem:[#allocation2 + $0x238] sm:$0xff]
    %v152 = vld [vmem:[#allocation2 + $0x240] sm:$0xff]
    %v153 = vld [vmem:[#allocation2 + $0x248] sm:$0xff]
    %v154 = vld [vmem:[#allocation2 + $0x250] sm:$0xff]
    %v155 = vld [vmem:[#allocation2 + $0x258] sm:$0xff]
    %v156 = vld [vmem:[#allocation2 + $0x260] sm:$0xff]
    %v157 = vld [vmem:[#allocation2 + $0x268] sm:$0xff]
    %v158 = vld [vmem:[#allocation2 + $0x270] sm:$0xff]
    %v159 = vld [vmem:[#allocation2 + $0x278] sm:$0xff]
    %v160 = vld [vmem:[#allocation2 + $0x280] sm:$0xff]
    %v161 = vld [vmem:[#allocation2 + $0x288] sm:$0xff]
    %v162 = vld [vmem:[#allocation2 + $0x290] sm:$0xff]
    %v163 = vld [vmem:[#allocation2 + $0x298] sm:$0xff]
    %v164 = vld [vmem:[#allocation2 + $0x2a0] sm:$0xff]
    %v165 = vld [vmem:[#allocation2 + $0x2a8] sm:$0xff]
    %v166 = vld [vmem:[#allocation2 + $0x2b0] sm:$0xff]
    %v167 = vld [vmem:[#allocation2 + $0x2b8] sm:$0xff]
    %v168 = vld [vmem:[#allocation2 + $0x2c0] sm:$0xff]
    %v169 = vld [vmem:[#allocation2 + $0x2c8] sm:$0xff]
    %v170 = vld [vmem:[#allocation2 + $0x2d0] sm:$0xff]
    %v171 = vld [vmem:[#allocation2 + $0x2d8] sm:$0xff]
    %v172 = vld [vmem:[#allocation2 + $0x2e0] sm:$0xff]
    %v173 = vld [vmem:[#allocation2 + $0x2e8] sm:$0xff]
    %v174 = vld [vmem:[#allocation2 + $0x2f0] sm:$0xff]
    %v175 = vld [vmem:[#allocation2 + $0x2f8] sm:$0xff]
    %v176 = vld [vmem:[#allocation2 + $0x300] sm:$0xff]
    %v177 = vld [vmem:[#allocation2 + $0x308] sm:$0xff]
    %v178 = vld [vmem:[#allocation2 + $0x310] sm:$0xff]
    %v179 = vld [vmem:[#allocation2 + $0x318] sm:$0xff]
    %v180 = vld [vmem:[#allocation2 + $0x320] sm:$0xff]
    %v181 = vld [vmem:[#allocation2 + $0x328] sm:$0xff]
    %v182 = vld [vmem:[#allocation2 + $0x330] sm:$0xff]
    %v183 = vld [vmem:[#allocation2 + $0x338] sm:$0xff]
    %v184 = vld [vmem:[#allocation2 + $0x340] sm:$0xff]
    %v185 = vld [vmem:[#allocation2 + $0x348] sm:$0xff]
    %v186 = vld [vmem:[#allocation2 + $0x350] sm:$0xff]
    %v187 = vld [vmem:[#allocation2 + $0x358] sm:$0xff]
    %v188 = vld [vmem:[#allocation2 + $0x360] sm:$0xff]
    %v189 = vld [vmem:[#allocation2 + $0x368] sm:$0xff]
    %v190 = vld [vmem:[#allocation2 + $0x370] sm:$0xff]
    %v191 = vld [vmem:[#allocation2 + $0x378] sm:$0xff]
    %v192 = vld [vmem:[#allocation2 + $0x380] sm:$0xff]
    %v193 = vld [vmem:[#allocation2 + $0x388] sm:$0xff]
    %v194 = vld [vmem:[#allocation2 + $0x390] sm:$0xff]
    %v195 = vld [vmem:[#allocation2 + $0x398] sm:$0xff]
    %v196 = vld [vmem:[#allocation2 + $0x3a0] sm:$0xff]
    %v197 = vld [vmem:[#allocation2 + $0x3a8] sm:$0xff]
    %v198 = vld [vmem:[#allocation2 + $0x3b0] sm:$0xff]
    %v199 = vld [vmem:[#allocation2 + $0x3b8] sm:$0xff]
    %v200 = vld [vmem:[#allocation2 + $0x3c0] sm:$0xff]
    %v201 = vld [vmem:[#allocation2 + $0x3c8] sm:$0xff]
    %v202 = vld [vmem:[#allocation2 + $0x3d0] sm:$0xff]
    %v203 = vld [vmem:[#allocation2 + $0x3d8] sm:$0xff]
    %v204 = vld [vmem:[#allocation2 + $0x3e0] sm:$0xff]
    %v205 = vld [vmem:[#allocation2 + $0x3e8] sm:$0xff]
    %v206 = vld [vmem:[#allocation2 + $0x3f0] sm:$0xff]
    %v207 = vld [vmem:[#allocation2 + $0x3f8] sm:$0xff]
    %v208 = vld [vmem:[%s3] sm:$0xf]
    %v210 = vperm.slane %v208, 0
    %v211 = vperm.slane %v208, 1
    %v212 = vperm.slane %v208, 2
    %v213 = vperm.slane %v208, 3
    %218 = vmatpush.msra.mxu0 %v140
    %219 = vmatpush.msra.mxu0 %v136
    %220 = vmatpush.msra.mxu0 %v132
    %221 = vmatpush.msra.mxu0 %v128
    %222 = vmatpush.msra.mxu0 %v124
    %223 = vmatpush.msra.mxu0 %v120
    %224 = vmatpush.msra.mxu0 %v116
    %225 = vmatpush.msra.mxu0 %v112
    %226 = vmatpush.msra.mxu0 %v108
    %227 = vmatpush.msra.mxu0 %v104
    %228 = vmatpush.msra.mxu0 %v100
    %229 = vmatpush.msra.mxu0 %v96
    %230 = vmatpush.msra.mxu0 %v92
    %231 = vmatpush.msra.mxu0 %v88
    %232 = vmatpush.msra.mxu0 %v84
    %233 = vmatpush.msra.mxu0 %v80
    %234 = vmatmul.f32.gmra.mxu0 %v78
    %v235 = vpop.f32.mrf.mxu0
    %v236 = vadd.f32 %v210, %v235
    %237 = vdwg.mxu0
    %238 = vmatpush.msra.mxu0 %v204
    %239 = vmatpush.msra.mxu0 %v200
    %240 = vmatpush.msra.mxu0 %v196
    %241 = vmatpush.msra.mxu0 %v192
    %242 = vmatpush.msra.mxu0 %v188
    %243 = vmatpush.msra.mxu0 %v184
    %244 = vmatpush.msra.mxu0 %v180
    %245 = vmatpush.msra.mxu0 %v176
    %246 = vmatpush.msra.mxu0 %v172
    %247 = vmatpush.msra.mxu0 %v168
    %248 = vmatpush.msra.mxu0 %v164
    %249 = vmatpush.msra.mxu0 %v160
    %250 = vmatpush.msra.mxu0 %v156
    %251 = vmatpush.msra.mxu0 %v152
    %252 = vmatpush.msra.mxu0 %v148
    %253 = vmatpush.msra.mxu0 %v144
    %254 = vmatmul.f32.gmra.mxu0 %v79
    %v255 = vpop.f32.mrf.mxu0
    %v256 = vadd.f32 %v236, %v255
    %257 = vdwg.mxu0
    %258 = vmatpush.msra.mxu0 %v141
    %259 = vmatpush.msra.mxu0 %v137
    %260 = vmatpush.msra.mxu0 %v133
    %261 = vmatpush.msra.mxu0 %v129
    %262 = vmatpush.msra.mxu0 %v125
    %263 = vmatpush.msra.mxu0 %v121
    %264 = vmatpush.msra.mxu0 %v117
    %265 = vmatpush.msra.mxu0 %v113
    %266 = vmatpush.msra.mxu0 %v109
    %267 = vmatpush.msra.mxu0 %v105
    %268 = vmatpush.msra.mxu0 %v101
    %269 = vmatpush.msra.mxu0 %v97
    %270 = vmatpush.msra.mxu0 %v93
    %271 = vmatpush.msra.mxu0 %v89
    %272 = vmatpush.msra.mxu0 %v85
    %273 = vmatpush.msra.mxu0 %v81
    %274 = vmatmul.f32.gmra.mxu0 %v78
    %v275 = vpop.f32.mrf.mxu0
    %v276 = vadd.f32 %v211, %v275
    %277 = vdwg.mxu0
    %278 = vmatpush.msra.mxu0 %v205
    %279 = vmatpush.msra.mxu0 %v201
    %280 = vmatpush.msra.mxu0 %v197
    %281 = vmatpush.msra.mxu0 %v193
    %282 = vmatpush.msra.mxu0 %v189
    %283 = vmatpush.msra.mxu0 %v185
    %284 = vmatpush.msra.mxu0 %v181
    %285 = vmatpush.msra.mxu0 %v177
    %286 = vmatpush.msra.mxu0 %v173
    %287 = vmatpush.msra.mxu0 %v169
    %288 = vmatpush.msra.mxu0 %v165
    %289 = vmatpush.msra.mxu0 %v161
    %290 = vmatpush.msra.mxu0 %v157
    %291 = vmatpush.msra.mxu0 %v153
    %292 = vmatpush.msra.mxu0 %v149
    %293 = vmatpush.msra.mxu0 %v145
    %294 = vmatmul.f32.gmra.mxu0 %v79
    %v295 = vpop.f32.mrf.mxu0
    %v296 = vadd.f32 %v276, %v295
    %297 = vdwg.mxu0
    %298 = vmatpush.msra.mxu0 %v142
    %299 = vmatpush.msra.mxu0 %v138
    %300 = vmatpush.msra.mxu0 %v134
    %301 = vmatpush.msra.mxu0 %v130
    %302 = vmatpush.msra.mxu0 %v126
    %303 = vmatpush.msra.mxu0 %v122
    %304 = vmatpush.msra.mxu0 %v118
    %305 = vmatpush.msra.mxu0 %v114
    %306 = vmatpush.msra.mxu0 %v110
    %307 = vmatpush.msra.mxu0 %v106
    %308 = vmatpush.msra.mxu0 %v102
    %309 = vmatpush.msra.mxu0 %v98
    %310 = vmatpush.msra.mxu0 %v94
    %311 = vmatpush.msra.mxu0 %v90
    %312 = vmatpush.msra.mxu0 %v86
    %313 = vmatpush.msra.mxu0 %v82
    %314 = vmatmul.f32.gmra.mxu0 %v78
    %v315 = vpop.f32.mrf.mxu0
    %v316 = vadd.f32 %v212, %v315
    %317 = vdwg.mxu0
    %318 = vmatpush.msra.mxu0 %v206
    %319 = vmatpush.msra.mxu0 %v202
    %320 = vmatpush.msra.mxu0 %v198
    %321 = vmatpush.msra.mxu0 %v194
    %322 = vmatpush.msra.mxu0 %v190
    %323 = vmatpush.msra.mxu0 %v186
    %324 = vmatpush.msra.mxu0 %v182
    %325 = vmatpush.msra.mxu0 %v178
    %326 = vmatpush.msra.mxu0 %v174
    %327 = vmatpush.msra.mxu0 %v170
    %328 = vmatpush.msra.mxu0 %v166
    %329 = vmatpush.msra.mxu0 %v162
    %330 = vmatpush.msra.mxu0 %v158
    %331 = vmatpush.msra.mxu0 %v154
    %332 = vmatpush.msra.mxu0 %v150
    %333 = vmatpush.msra.mxu0 %v146
    %334 = vmatmul.f32.gmra.mxu0 %v79
    %v335 = vpop.f32.mrf.mxu0
    %v336 = vadd.f32 %v316, %v335
    %337 = vdwg.mxu0
    %338 = vmatpush.msra.mxu0 %v143
    %339 = vmatpush.msra.mxu0 %v139
    %340 = vmatpush.msra.mxu0 %v135
    %341 = vmatpush.msra.mxu0 %v131
    %342 = vmatpush.msra.mxu0 %v127
    %343 = vmatpush.msra.mxu0 %v123
    %344 = vmatpush.msra.mxu0 %v119
    %345 = vmatpush.msra.mxu0 %v115
    %346 = vmatpush.msra.mxu0 %v111
    %347 = vmatpush.msra.mxu0 %v107
    %348 = vmatpush.msra.mxu0 %v103
    %349 = vmatpush.msra.mxu0 %v99
    %350 = vmatpush.msra.mxu0 %v95
    %351 = vmatpush.msra.mxu0 %v91
    %352 = vmatpush.msra.mxu0 %v87
    %353 = vmatpush.msra.mxu0 %v83
    %354 = vmatmul.f32.gmra.mxu0 %v78
    %v355 = vpop.f32.mrf.mxu0
    %v356 = vadd.f32 %v213, %v355
    %357 = vdwg.mxu0
    %358 = vmatpush.msra.mxu0 %v207
    %359 = vmatpush.msra.mxu0 %v203
    %360 = vmatpush.msra.mxu0 %v199
    %361 = vmatpush.msra.mxu0 %v195
    %362 = vmatpush.msra.mxu0 %v191
    %363 = vmatpush.msra.mxu0 %v187
    %364 = vmatpush.msra.mxu0 %v183
    %365 = vmatpush.msra.mxu0 %v179
    %366 = vmatpush.msra.mxu0 %v175
    %367 = vmatpush.msra.mxu0 %v171
    %368 = vmatpush.msra.mxu0 %v167
    %369 = vmatpush.msra.mxu0 %v163
    %370 = vmatpush.msra.mxu0 %v159
    %371 = vmatpush.msra.mxu0 %v155
    %372 = vmatpush.msra.mxu0 %v151
    %373 = vmatpush.msra.mxu0 %v147
    %374 = vmatmul.f32.gmra.mxu0 %v79
    %v375 = vpop.f32.mrf.mxu0
    %v376 = vadd.f32 %v356, %v375
    %377 = vdwg.mxu0
    %v378 = vxor.u32 %v256, 2147483648
    %v379 = vmul.f32 %v378, 1.442695
    %v380 = vpow.pop %v379
    %v381 = vadd.f32 %v380, 1.0
    %v382 = vrcp.pop %v381
    %v383 = vmul.f32 %v381, %v382
    %v384 = vsub.f32 1.0, %v383
    %v385 = vmul.f32 %v382, %v384
    %v386 = vadd.f32 %v382, %v385
    %vm387 = vweird.f32 %v381
    %vm388 = vweird.f32 %v382
    %vm389 = vmor %vm387, %vm388
    %v390 = vsel %vm389, %v382, %v386
    %v391 = vand.u32 2147483647, %v381
    %vm392 = vcmp.eq.f32.partialorder %v391, 8.507059e+37
    %v393 = vand.u32 %v381, 2147483648
    %v394 = vor.u32 1.1754944e-38, %v393
    %v395 = vsel %vm392, %v394, %v390
    %v396 = vmul.f32 1.0, %v395
    %v397 = vxor.u32 %v296, 2147483648
    %v398 = vmul.f32 %v397, 1.442695
    %v399 = vpow.pop %v398
    %v400 = vadd.f32 %v399, 1.0
    %v401 = vrcp.pop %v400
    %v402 = vmul.f32 %v400, %v401
    %v403 = vsub.f32 1.0, %v402
    %v404 = vmul.f32 %v401, %v403
    %v405 = vadd.f32 %v401, %v404
    %vm406 = vweird.f32 %v400
    %vm407 = vweird.f32 %v401
    %vm408 = vmor %vm406, %vm407
    %v409 = vsel %vm408, %v401, %v405
    %v410 = vand.u32 2147483647, %v400
    %vm411 = vcmp.eq.f32.partialorder %v410, 8.507059e+37
    %v412 = vand.u32 %v400, 2147483648
    %v413 = vor.u32 1.1754944e-38, %v412
    %v414 = vsel %vm411, %v413, %v409
    %v415 = vmul.f32 1.0, %v414
    %v416 = vmul.f32 %v396, %v376
    %v417 = vadd.f32 %v336, %v416
    %v418 = vtanh.pop %v417
    %v419 = vsub.f32 1.0, %v415
    %v420 = vmul.f32 %v419, %v418
    %v421 = vmul.f32 %v415, %v79
    %v422 = vadd.f32 %v420, %v421
    %423 = vst [vmem:[%s8] sm:$0xff] %v422
    %s424 = scalar_lea.vmem %s1, 8
    %v425 = vld [vmem:[%s424] sm:$0xff]
    %v426 = vld [vmem:[#allocation4] sm:$0xff]
    %v427 = vld [vmem:[#allocation4 + $0x8] sm:$0xff]
    %v428 = vld [vmem:[#allocation4 + $0x10] sm:$0xff]
    %v429 = vld [vmem:[#allocation4 + $0x18] sm:$0xff]
    %v430 = vld [vmem:[#allocation4 + $0x20] sm:$0xff]
    %v431 = vld [vmem:[#allocation4 + $0x28] sm:$0xff]
    %v432 = vld [vmem:[#allocation4 + $0x30] sm:$0xff]
    %v433 = vld [vmem:[#allocation4 + $0x38] sm:$0xff]
    %v434 = vld [vmem:[#allocation4 + $0x40] sm:$0xff]
    %v435 = vld [vmem:[#allocation4 + $0x48] sm:$0xff]
    %v436 = vld [vmem:[#allocation4 + $0x50] sm:$0xff]
    %v437 = vld [vmem:[#allocation4 + $0x58] sm:$0xff]
    %v438 = vld [vmem:[#allocation4 + $0x60] sm:$0xff]
    %v439 = vld [vmem:[#allocation4 + $0x68] sm:$0xff]
    %v440 = vld [vmem:[#allocation4 + $0x70] sm:$0xff]
    %v441 = vld [vmem:[#allocation4 + $0x78] sm:$0xff]
    %v442 = vld [vmem:[#allocation4 + $0x80] sm:$0xff]
    %v443 = vld [vmem:[#allocation4 + $0x88] sm:$0xff]
    %v444 = vld [vmem:[#allocation4 + $0x90] sm:$0xff]
    %v445 = vld [vmem:[#allocation4 + $0x98] sm:$0xff]
    %v446 = vld [vmem:[#allocation4 + $0xa0] sm:$0xff]
    %v447 = vld [vmem:[#allocation4 + $0xa8] sm:$0xff]
    %v448 = vld [vmem:[#allocation4 + $0xb0] sm:$0xff]
    %v449 = vld [vmem:[#allocation4 + $0xb8] sm:$0xff]
    %v450 = vld [vmem:[#allocation4 + $0xc0] sm:$0xff]
    %v451 = vld [vmem:[#allocation4 + $0xc8] sm:$0xff]
    %v452 = vld [vmem:[#allocation4 + $0xd0] sm:$0xff]
    %v453 = vld [vmem:[#allocation4 + $0xd8] sm:$0xff]
    %v454 = vld [vmem:[#allocation4 + $0xe0] sm:$0xff]
    %v455 = vld [vmem:[#allocation4 + $0xe8] sm:$0xff]
    %v456 = vld [vmem:[#allocation4 + $0xf0] sm:$0xff]
    %v457 = vld [vmem:[#allocation4 + $0xf8] sm:$0xff]
    %v458 = vld [vmem:[#allocation4 + $0x100] sm:$0xff]
    %v459 = vld [vmem:[#allocation4 + $0x108] sm:$0xff]
    %v460 = vld [vmem:[#allocation4 + $0x110] sm:$0xff]
    %v461 = vld [vmem:[#allocation4 + $0x118] sm:$0xff]
    %v462 = vld [vmem:[#allocation4 + $0x120] sm:$0xff]
    %v463 = vld [vmem:[#allocation4 + $0x128] sm:$0xff]
    %v464 = vld [vmem:[#allocation4 + $0x130] sm:$0xff]
    %v465 = vld [vmem:[#allocation4 + $0x138] sm:$0xff]
    %v466 = vld [vmem:[#allocation4 + $0x140] sm:$0xff]
    %v467 = vld [vmem:[#allocation4 + $0x148] sm:$0xff]
    %v468 = vld [vmem:[#allocation4 + $0x150] sm:$0xff]
    %v469 = vld [vmem:[#allocation4 + $0x158] sm:$0xff]
    %v470 = vld [vmem:[#allocation4 + $0x160] sm:$0xff]
    %v471 = vld [vmem:[#allocation4 + $0x168] sm:$0xff]
    %v472 = vld [vmem:[#allocation4 + $0x170] sm:$0xff]
    %v473 = vld [vmem:[#allocation4 + $0x178] sm:$0xff]
    %v474 = vld [vmem:[#allocation4 + $0x180] sm:$0xff]
    %v475 = vld [vmem:[#allocation4 + $0x188] sm:$0xff]
    %v476 = vld [vmem:[#allocation4 + $0x190] sm:$0xff]
    %v477 = vld [vmem:[#allocation4 + $0x198] sm:$0xff]
    %v478 = vld [vmem:[#allocation4 + $0x1a0] sm:$0xff]
    %v479 = vld [vmem:[#allocation4 + $0x1a8] sm:$0xff]
    %v480 = vld [vmem:[#allocation4 + $0x1b0] sm:$0xff]
    %v481 = vld [vmem:[#allocation4 + $0x1b8] sm:$0xff]
    %v482 = vld [vmem:[#allocation4 + $0x1c0] sm:$0xff]
    %v483 = vld [vmem:[#allocation4 + $0x1c8] sm:$0xff]
    %v484 = vld [vmem:[#allocation4 + $0x1d0] sm:$0xff]
    %v485 = vld [vmem:[#allocation4 + $0x1d8] sm:$0xff]
    %v486 = vld [vmem:[#allocation4 + $0x1e0] sm:$0xff]
    %v487 = vld [vmem:[#allocation4 + $0x1e8] sm:$0xff]
    %v488 = vld [vmem:[#allocation4 + $0x1f0] sm:$0xff]
    %v489 = vld [vmem:[#allocation4 + $0x1f8] sm:$0xff]
    %v490 = vld [vmem:[#allocation4 + $0x200] sm:$0xff]
    %v491 = vld [vmem:[#allocation4 + $0x208] sm:$0xff]
    %v492 = vld [vmem:[#allocation4 + $0x210] sm:$0xff]
    %v493 = vld [vmem:[#allocation4 + $0x218] sm:$0xff]
    %v494 = vld [vmem:[#allocation4 + $0x220] sm:$0xff]
    %v495 = vld [vmem:[#allocation4 + $0x228] sm:$0xff]
    %v496 = vld [vmem:[#allocation4 + $0x230] sm:$0xff]
    %v497 = vld [vmem:[#allocation4 + $0x238] sm:$0xff]
    %v498 = vld [vmem:[#allocation4 + $0x240] sm:$0xff]
    %v499 = vld [vmem:[#allocation4 + $0x248] sm:$0xff]
    %v500 = vld [vmem:[#allocation4 + $0x250] sm:$0xff]
    %v501 = vld [vmem:[#allocation4 + $0x258] sm:$0xff]
    %v502 = vld [vmem:[#allocation4 + $0x260] sm:$0xff]
    %v503 = vld [vmem:[#allocation4 + $0x268] sm:$0xff]
    %v504 = vld [vmem:[#allocation4 + $0x270] sm:$0xff]
    %v505 = vld [vmem:[#allocation4 + $0x278] sm:$0xff]
    %v506 = vld [vmem:[#allocation4 + $0x280] sm:$0xff]
    %v507 = vld [vmem:[#allocation4 + $0x288] sm:$0xff]
    %v508 = vld [vmem:[#allocation4 + $0x290] sm:$0xff]
    %v509 = vld [vmem:[#allocation4 + $0x298] sm:$0xff]
    %v510 = vld [vmem:[#allocation4 + $0x2a0] sm:$0xff]
    %v511 = vld [vmem:[#allocation4 + $0x2a8] sm:$0xff]
    %v512 = vld [vmem:[#allocation4 + $0x2b0] sm:$0xff]
    %v513 = vld [vmem:[#allocation4 + $0x2b8] sm:$0xff]
    %v514 = vld [vmem:[#allocation4 + $0x2c0] sm:$0xff]
    %v515 = vld [vmem:[#allocation4 + $0x2c8] sm:$0xff]
    %v516 = vld [vmem:[#allocation4 + $0x2d0] sm:$0xff]
    %v517 = vld [vmem:[#allocation4 + $0x2d8] sm:$0xff]
    %v518 = vld [vmem:[#allocation4 + $0x2e0] sm:$0xff]
    %v519 = vld [vmem:[#allocation4 + $0x2e8] sm:$0xff]
    %v520 = vld [vmem:[#allocation4 + $0x2f0] sm:$0xff]
    %v521 = vld [vmem:[#allocation4 + $0x2f8] sm:$0xff]
    %v522 = vld [vmem:[#allocation4 + $0x300] sm:$0xff]
    %v523 = vld [vmem:[#allocation4 + $0x308] sm:$0xff]
    %v524 = vld [vmem:[#allocation4 + $0x310] sm:$0xff]
    %v525 = vld [vmem:[#allocation4 + $0x318] sm:$0xff]
    %v526 = vld [vmem:[#allocation4 + $0x320] sm:$0xff]
    %v527 = vld [vmem:[#allocation4 + $0x328] sm:$0xff]
    %v528 = vld [vmem:[#allocation4 + $0x330] sm:$0xff]
    %v529 = vld [vmem:[#allocation4 + $0x338] sm:$0xff]
    %v530 = vld [vmem:[#allocation4 + $0x340] sm:$0xff]
    %v531 = vld [vmem:[#allocation4 + $0x348] sm:$0xff]
    %v532 = vld [vmem:[#allocation4 + $0x350] sm:$0xff]
    %v533 = vld [vmem:[#allocation4 + $0x358] sm:$0xff]
    %v534 = vld [vmem:[#allocation4 + $0x360] sm:$0xff]
    %v535 = vld [vmem:[#allocation4 + $0x368] sm:$0xff]
    %v536 = vld [vmem:[#allocation4 + $0x370] sm:$0xff]
    %v537 = vld [vmem:[#allocation4 + $0x378] sm:$0xff]
    %v538 = vld [vmem:[#allocation4 + $0x380] sm:$0xff]
    %v539 = vld [vmem:[#allocation4 + $0x388] sm:$0xff]
    %v540 = vld [vmem:[#allocation4 + $0x390] sm:$0xff]
    %v541 = vld [vmem:[#allocation4 + $0x398] sm:$0xff]
    %v542 = vld [vmem:[#allocation4 + $0x3a0] sm:$0xff]
    %v543 = vld [vmem:[#allocation4 + $0x3a8] sm:$0xff]
    %v544 = vld [vmem:[#allocation4 + $0x3b0] sm:$0xff]
    %v545 = vld [vmem:[#allocation4 + $0x3b8] sm:$0xff]
    %v546 = vld [vmem:[#allocation4 + $0x3c0] sm:$0xff]
    %v547 = vld [vmem:[#allocation4 + $0x3c8] sm:$0xff]
    %v548 = vld [vmem:[#allocation4 + $0x3d0] sm:$0xff]
    %v549 = vld [vmem:[#allocation4 + $0x3d8] sm:$0xff]
    %v550 = vld [vmem:[#allocation4 + $0x3e0] sm:$0xff]
    %v551 = vld [vmem:[#allocation4 + $0x3e8] sm:$0xff]
    %v552 = vld [vmem:[#allocation4 + $0x3f0] sm:$0xff]
    %v553 = vld [vmem:[#allocation4 + $0x3f8] sm:$0xff]
    %v554 = vld [vmem:[%s5] sm:$0xf]
    %v556 = vperm.slane %v554, 0
    %v557 = vperm.slane %v554, 1
    %v558 = vperm.slane %v554, 2
    %v559 = vperm.slane %v554, 3
    %564 = vmatpush.msra.mxu0 %v486
    %565 = vmatpush.msra.mxu0 %v482
    %566 = vmatpush.msra.mxu0 %v478
    %567 = vmatpush.msra.mxu0 %v474
    %568 = vmatpush.msra.mxu0 %v470
    %569 = vmatpush.msra.mxu0 %v466
    %570 = vmatpush.msra.mxu0 %v462
    %571 = vmatpush.msra.mxu0 %v458
    %572 = vmatpush.msra.mxu0 %v454
    %573 = vmatpush.msra.mxu0 %v450
    %574 = vmatpush.msra.mxu0 %v446
    %575 = vmatpush.msra.mxu0 %v442
    %576 = vmatpush.msra.mxu0 %v438
    %577 = vmatpush.msra.mxu0 %v434
    %578 = vmatpush.msra.mxu0 %v430
    %579 = vmatpush.msra.mxu0 %v426
    %580 = vmatmul.f32.gmra.mxu0 %v422
    %v581 = vpop.f32.mrf.mxu0
    %v582 = vadd.f32 %v556, %v581
    %583 = vdwg.mxu0
    %584 = vmatpush.msra.mxu0 %v550
    %585 = vmatpush.msra.mxu0 %v546
    %586 = vmatpush.msra.mxu0 %v542
    %587 = vmatpush.msra.mxu0 %v538
    %588 = vmatpush.msra.mxu0 %v534
    %589 = vmatpush.msra.mxu0 %v530
    %590 = vmatpush.msra.mxu0 %v526
    %591 = vmatpush.msra.mxu0 %v522
    %592 = vmatpush.msra.mxu0 %v518
    %593 = vmatpush.msra.mxu0 %v514
    %594 = vmatpush.msra.mxu0 %v510
    %595 = vmatpush.msra.mxu0 %v506
    %596 = vmatpush.msra.mxu0 %v502
    %597 = vmatpush.msra.mxu0 %v498
    %598 = vmatpush.msra.mxu0 %v494
    %599 = vmatpush.msra.mxu0 %v490
    %600 = vmatmul.f32.gmra.mxu0 %v425
    %v601 = vpop.f32.mrf.mxu0
    %v602 = vadd.f32 %v582, %v601
    %603 = vdwg.mxu0
    %604 = vmatpush.msra.mxu0 %v487
    %605 = vmatpush.msra.mxu0 %v483
    %606 = vmatpush.msra.mxu0 %v479
    %607 = vmatpush.msra.mxu0 %v475
    %608 = vmatpush.msra.mxu0 %v471
    %609 = vmatpush.msra.mxu0 %v467
    %610 = vmatpush.msra.mxu0 %v463
    %611 = vmatpush.msra.mxu0 %v459
    %612 = vmatpush.msra.mxu0 %v455
    %613 = vmatpush.msra.mxu0 %v451
    %614 = vmatpush.msra.mxu0 %v447
    %615 = vmatpush.msra.mxu0 %v443
    %616 = vmatpush.msra.mxu0 %v439
    %617 = vmatpush.msra.mxu0 %v435
    %618 = vmatpush.msra.mxu0 %v431
    %619 = vmatpush.msra.mxu0 %v427
    %620 = vmatmul.f32.gmra.mxu0 %v422
    %v621 = vpop.f32.mrf.mxu0
    %v622 = vadd.f32 %v557, %v621
    %623 = vdwg.mxu0
    %624 = vmatpush.msra.mxu0 %v551
    %625 = vmatpush.msra.mxu0 %v547
    %626 = vmatpush.msra.mxu0 %v543
    %627 = vmatpush.msra.mxu0 %v539
    %628 = vmatpush.msra.mxu0 %v535
    %629 = vmatpush.msra.mxu0 %v531
    %630 = vmatpush.msra.mxu0 %v527
    %631 = vmatpush.msra.mxu0 %v523
    %632 = vmatpush.msra.mxu0 %v519
    %633 = vmatpush.msra.mxu0 %v515
    %634 = vmatpush.msra.mxu0 %v511
    %635 = vmatpush.msra.mxu0 %v507
    %636 = vmatpush.msra.mxu0 %v503
    %637 = vmatpush.msra.mxu0 %v499
    %638 = vmatpush.msra.mxu0 %v495
    %639 = vmatpush.msra.mxu0 %v491
    %640 = vmatmul.f32.gmra.mxu0 %v425
    %v641 = vpop.f32.mrf.mxu0
    %v642 = vadd.f32 %v622, %v641
    %643 = vdwg.mxu0
    %644 = vmatpush.msra.mxu0 %v488
    %645 = vmatpush.msra.mxu0 %v484
    %646 = vmatpush.msra.mxu0 %v480
    %647 = vmatpush.msra.mxu0 %v476
    %648 = vmatpush.msra.mxu0 %v472
    %649 = vmatpush.msra.mxu0 %v468
    %650 = vmatpush.msra.mxu0 %v464
    %651 = vmatpush.msra.mxu0 %v460
    %652 = vmatpush.msra.mxu0 %v456
    %653 = vmatpush.msra.mxu0 %v452
    %654 = vmatpush.msra.mxu0 %v448
    %655 = vmatpush.msra.mxu0 %v444
    %656 = vmatpush.msra.mxu0 %v440
    %657 = vmatpush.msra.mxu0 %v436
    %658 = vmatpush.msra.mxu0 %v432
    %659 = vmatpush.msra.mxu0 %v428
    %660 = vmatmul.f32.gmra.mxu0 %v422
    %v661 = vpop.f32.mrf.mxu0
    %v662 = vadd.f32 %v558, %v661
    %663 = vdwg.mxu0
    %664 = vmatpush.msra.mxu0 %v552
    %665 = vmatpush.msra.mxu0 %v548
    %666 = vmatpush.msra.mxu0 %v544
    %667 = vmatpush.msra.mxu0 %v540
    %668 = vmatpush.msra.mxu0 %v536
    %669 = vmatpush.msra.mxu0 %v532
    %670 = vmatpush.msra.mxu0 %v528
    %671 = vmatpush.msra.mxu0 %v524
    %672 = vmatpush.msra.mxu0 %v520
    %673 = vmatpush.msra.mxu0 %v516
    %674 = vmatpush.msra.mxu0 %v512
    %675 = vmatpush.msra.mxu0 %v508
    %676 = vmatpush.msra.mxu0 %v504
    %677 = vmatpush.msra.mxu0 %v500
    %678 = vmatpush.msra.mxu0 %v496
    %679 = vmatpush.msra.mxu0 %v492
    %680 = vmatmul.f32.gmra.mxu0 %v425
    %v681 = vpop.f32.mrf.mxu0
    %v682 = vadd.f32 %v662, %v681
    %683 = vdwg.mxu0
    %684 = vmatpush.msra.mxu0 %v489
    %685 = vmatpush.msra.mxu0 %v485
    %686 = vmatpush.msra.mxu0 %v481
    %687 = vmatpush.msra.mxu0 %v477
    %688 = vmatpush.msra.mxu0 %v473
    %689 = vmatpush.msra.mxu0 %v469
    %690 = vmatpush.msra.mxu0 %v465
    %691 = vmatpush.msra.mxu0 %v461
    %692 = vmatpush.msra.mxu0 %v457
    %693 = vmatpush.msra.mxu0 %v453
    %694 = vmatpush.msra.mxu0 %v449
    %695 = vmatpush.msra.mxu0 %v445
    %696 = vmatpush.msra.mxu0 %v441
    %697 = vmatpush.msra.mxu0 %v437
    %698 = vmatpush.msra.mxu0 %v433
    %699 = vmatpush.msra.mxu0 %v429
    %700 = vmatmul.f32.gmra.mxu0 %v422
    %v701 = vpop.f32.mrf.mxu0
    %v702 = vadd.f32 %v559, %v701
    %703 = vdwg.mxu0
    %704 = vmatpush.msra.mxu0 %v553
    %705 = vmatpush.msra.mxu0 %v549
    %706 = vmatpush.msra.mxu0 %v545
    %707 = vmatpush.msra.mxu0 %v541
    %708 = vmatpush.msra.mxu0 %v537
    %709 = vmatpush.msra.mxu0 %v533
    %710 = vmatpush.msra.mxu0 %v529
    %711 = vmatpush.msra.mxu0 %v525
    %712 = vmatpush.msra.mxu0 %v521
    %713 = vmatpush.msra.mxu0 %v517
    %714 = vmatpush.msra.mxu0 %v513
    %715 = vmatpush.msra.mxu0 %v509
    %716 = vmatpush.msra.mxu0 %v505
    %717 = vmatpush.msra.mxu0 %v501
    %718 = vmatpush.msra.mxu0 %v497
    %719 = vmatpush.msra.mxu0 %v493
    %720 = vmatmul.f32.gmra.mxu0 %v425
    %v721 = vpop.f32.mrf.mxu0
    %v722 = vadd.f32 %v702, %v721
    %723 = vdwg.mxu0
    %v724 = vxor.u32 %v602, 2147483648
    %v725 = vmul.f32 %v724, 1.442695
    %v726 = vpow.pop %v725
    %v727 = vadd.f32 %v726, 1.0
    %v728 = vrcp.pop %v727
    %v729 = vmul.f32 %v727, %v728
    %v730 = vsub.f32 1.0, %v729
    %v731 = vmul.f32 %v728, %v730
    %v732 = vadd.f32 %v728, %v731
    %vm733 = vweird.f32 %v727
    %vm734 = vweird.f32 %v728
    %vm735 = vmor %vm733, %vm734
    %v736 = vsel %vm735, %v728, %v732
    %v737 = vand.u32 2147483647, %v727
    %vm738 = vcmp.eq.f32.partialorder %v737, 8.507059e+37
    %v739 = vand.u32 %v727, 2147483648
    %v740 = vor.u32 1.1754944e-38, %v739
    %v741 = vsel %vm738, %v740, %v736
    %v742 = vmul.f32 1.0, %v741
    %v743 = vxor.u32 %v642, 2147483648
    %v744 = vmul.f32 %v743, 1.442695
    %v745 = vpow.pop %v744
    %v746 = vadd.f32 %v745, 1.0
    %v747 = vrcp.pop %v746
    %v748 = vmul.f32 %v746, %v747
    %v749 = vsub.f32 1.0, %v748
    %v750 = vmul.f32 %v747, %v749
    %v751 = vadd.f32 %v747, %v750
    %vm752 = vweird.f32 %v746
    %vm753 = vweird.f32 %v747
    %vm754 = vmor %vm752, %vm753
    %v755 = vsel %vm754, %v747, %v751
    %v756 = vand.u32 2147483647, %v746
    %vm757 = vcmp.eq.f32.partialorder %v756, 8.507059e+37
    %v758 = vand.u32 %v746, 2147483648
    %v759 = vor.u32 1.1754944e-38, %v758
    %v760 = vsel %vm757, %v759, %v755
    %v761 = vmul.f32 1.0, %v760
    %v762 = vmul.f32 %v742, %v722
    %v763 = vadd.f32 %v682, %v762
    %v764 = vtanh.pop %v763
    %v765 = vsub.f32 1.0, %v761
    %v766 = vmul.f32 %v765, %v764
    %v767 = vmul.f32 %v761, %v425
    %v768 = vadd.f32 %v766, %v767
    %s769 = scalar_lea.vmem %s8, 8
    %770 = vst [vmem:[%s769] sm:$0xff] %v768
    %v771 = vld [vmem:[#allocation6] sm:$0xff]
    %v772 = vld [vmem:[#allocation6 + $0x8] sm:$0xff]
    %v773 = vld [vmem:[#allocation6 + $0x10] sm:$0xff]
    %v774 = vld [vmem:[#allocation6 + $0x18] sm:$0xff]
    %v775 = vld [vmem:[#allocation6 + $0x20] sm:$0xff]
    %v776 = vld [vmem:[#allocation6 + $0x28] sm:$0xff]
    %v777 = vld [vmem:[#allocation6 + $0x30] sm:$0xff]
    %v778 = vld [vmem:[#allocation6 + $0x38] sm:$0xff]
    %v779 = vld [vmem:[#allocation6 + $0x40] sm:$0xff]
    %v780 = vld [vmem:[#allocation6 + $0x48] sm:$0xff]
    %v781 = vld [vmem:[#allocation6 + $0x50] sm:$0xff]
    %v782 = vld [vmem:[#allocation6 + $0x58] sm:$0xff]
    %v783 = vld [vmem:[#allocation6 + $0x60] sm:$0xff]
    %v784 = vld [vmem:[#allocation6 + $0x68] sm:$0xff]
    %v785 = vld [vmem:[#allocation6 + $0x70] sm:$0xff]
    %v786 = vld [vmem:[#allocation6 + $0x78] sm:$0xff]
    %v787 = vld [vmem:[%s7] sm:$0x1]
    %v789 = vperm.slane %v787, 0
    %791 = vmatpush.msra.mxu0 %v786
    %792 = vmatpush.msra.mxu0 %v785
    %793 = vmatpush.msra.mxu0 %v784
    %794 = vmatpush.msra.mxu0 %v783
    %795 = vmatpush.msra.mxu0 %v782
    %796 = vmatpush.msra.mxu0 %v781
    %797 = vmatpush.msra.mxu0 %v780
    %798 = vmatpush.msra.mxu0 %v779
    %799 = vmatpush.msra.mxu0 %v778
    %800 = vmatpush.msra.mxu0 %v777
    %801 = vmatpush.msra.mxu0 %v776
    %802 = vmatpush.msra.mxu0 %v775
    %803 = vmatpush.msra.mxu0 %v774
    %804 = vmatpush.msra.mxu0 %v773
    %805 = vmatpush.msra.mxu0 %v772
    %806 = vmatpush.msra.mxu0 %v771
    %807 = vmatmul.f32.gmra.mxu0 %v768
    %v808 = vpop.f32.mrf.mxu0
    %v809 = vadd.f32 %v789, %v808
    %810 = vdwg.mxu0
    %811 = vst [vmem:[%s9] sm:$0xff] %v809
    // Predicated region
    $region46: #{crnn_decoder_forward.1} parent=1 // pred_check
      _
    $region47: #{crnn_decoder_forward.1} parent=1 // pred_check_branch
      %813 = sbr.rel (0) target = $region49
    $region48: #{crnn_decoder_forward.1} parent=1 // pred_region
      _
    $region49: #{crnn_decoder_forward.1} parent=1 // pred_fallthru
      _
    // Predicated region
    $region50: #{crnn_decoder_forward.1} parent=1 // pred_check
      _
    $region51: #{crnn_decoder_forward.1} parent=1 // pred_check_branch
      %815 = sbr.rel (0) target = $region53
    $region52: #{crnn_decoder_forward.1} parent=1 // pred_region
      _
    $region53: #{crnn_decoder_forward.1} parent=1 // pred_fallthru
      _
    // Predicated region
    $region54: #{crnn_decoder_forward.1} parent=1 // pred_check
      _
    $region55: #{crnn_decoder_forward.1} parent=1 // pred_check_branch
      %817 = sbr.rel (0) target = $region57
    $region56: #{crnn_decoder_forward.1} parent=1 // pred_region
      _
    $region57: #{crnn_decoder_forward.1} parent=1 // pred_fallthru
      _
    // Predicated region
    $region58: #{crnn_decoder_forward.1} parent=1 // pred_check
      _
    $region59: #{crnn_decoder_forward.1} parent=1 // pred_check_branch
      %819 = sbr.rel (0) target = $region61
    $region60: #{crnn_decoder_forward.1} parent=1 // pred_region
      _
    $region61: #{crnn_decoder_forward.1} parent=1 // pred_fallthru
      _
    %820 = vsyncpa [#allocation3], 1
    %821 = vsyncpa [#allocation5], 1

</llo_original>
